<compile_context>
chip_gen: v6e
topology: v6e:2x2x1
jax: 0.10.0
libtpu: 0.0.40
codegen_flags: <defaults>
</compile_context>

<pallas_src>
import functools

import jax
import jax.numpy as jnp
from jax.experimental import pallas as pl
from jax.experimental.pallas import tpu as pltpu


def _round_up(x, m):
    return (x + m - 1) // m * m


# -----------------------------------------------------------------------------
# Kernel
# -----------------------------------------------------------------------------
def _mlp_kernel(x_ref, w1_ref, b1_ref, w2_ref, b2_ref, w3_ref, b3_ref, o_ref, h_ref):
    cdt = w1_ref.dtype  # MXU compute dtype (bf16); accumulation is always fp32.

    # fc1 + ReLU. Hidden intermediate is stored in bf16 scratch: half the
    # vst/vld traffic vs fp32, and it would be cast to bf16 for the next
    # matmul anyway, so this is numerically identical.
    h1 = jnp.dot(x_ref[...], w1_ref[...], preferred_element_type=jnp.float32)
    h_ref[...] = jnp.maximum(h1 + b1_ref[...], 0.0).astype(cdt)

    # fc2 + ReLU
    h2 = jnp.dot(h_ref[...], w2_ref[...], preferred_element_type=jnp.float32)
    h_ref[...] = jnp.maximum(h2 + b2_ref[...], 0.0).astype(cdt)

    # dropout(p=0.2): eval-mode identity.
    # TODO(synk): training-mode stochastic dropout (pltpu.prng_seed +
    #             pltpu.stateful_bernoulli) not reproduced; PyTorch RNG streams
    #             cannot be matched bit-exactly.

    # fc3
    out = jnp.dot(h_ref[...], w3_ref[...], preferred_element_type=jnp.float32)
    o_ref[...] = (out + b3_ref[...]).astype(o_ref.dtype)


# -----------------------------------------------------------------------------
# Chip-aware VMEM plan
# -----------------------------------------------------------------------------
def _vmem_plan():
    """Returns (planning_budget_bytes, vmem_limit_bytes, force_grid_split).

    v5e/v6e: 128 MiB physical VMEM (scoped default is only 16/32 MiB -> raise it).
    v7x    : 64 MiB per TensorCore but 2 TCs -> keep the budget modest and make
             sure the row grid has >= 2 steps so both cores get work.
    """
    cap = None
    try:
        cap = int(pltpu.get_tpu_info().vmem_capacity_bytes)
    except Exception:
        try:
            kind = jax.devices()[0].device_kind.lower()
            if "v7" in kind:
                cap = 64 << 20
            elif any(v in kind for v in ("v4", "v5", "v6")):
                cap = 128 << 20
        except Exception:
            pass
    if cap is None:
        cap = 64 << 20  # conservative fallback (v7x-like)

    if cap >= (128 << 20):
        limit = 100 << 20          # v5e/v6e: use most of the 128 MiB physical
        force_split = False
    else:
        limit = 44 << 20           # v7x: 64 MiB/TC physical, leave headroom
        force_split = True         # 2 TCs -> want >= 2 parallel grid steps
    budget = limit - (6 << 20)     # headroom for compiler-internal scratch
    return budget, limit, force_split


# -----------------------------------------------------------------------------
# Row-tile selection
# -----------------------------------------------------------------------------
_TILE_LADDER = (512, 384, 256, 128, 64, 32, 16)  # all multiples of 16 (bf16 sublanes)


def _choose_tile_n(n, in_p, hid_p, out_p, w_bytes, budget, step_overhead_rows=64):
    """Largest-ish row tile whose working set fits the VMEM budget, picked to
    minimize (padded rows + per-grid-step overhead)."""
    weight_bytes = ((in_p * hid_p + hid_p * hid_p + hid_p * out_p) * w_bytes
                    + (2 * hid_p + out_p) * 4)          # Buffered(1) residents

    feasible = []
    for t in _TILE_LADDER:
        act = 2 * t * in_p * w_bytes     # double-buffered bf16 x tiles
        act += 2 * t * out_p * 4         # double-buffered fp32 out tiles
        act += t * hid_p * w_bytes       # bf16 hidden scratch
        if weight_bytes + act <= budget:
            feasible.append(t)
    if not feasible:
        # TODO(synk): for very large hidden on v7x, switch to K/N tiling over
        #             hid_p/out_p with an fp32 accumulator instead of collapsing
        #             the row tile (keeps the 256-row MXU filled).
        return 16

    def cost(t):  # padded rows + per-step overhead, in row-equivalents
        n_p = _round_up(max(n, 1), t)
        return n_p + (n_p // t) * step_overhead_rows

    return min(feasible, key=lambda t: (cost(t), -t))


# -----------------------------------------------------------------------------
# Parameter preparation (done ONCE, hoisted out of the per-call forward path)
# -----------------------------------------------------------------------------
def prepare_mlp_params(w1, b1, w2, b2, w3, b3, compute_dtype=jnp.bfloat16):
    """Pad feature dims to multiples of 128 (lane-dense tiles, unmasked stores)
    and cast weights to the MXU compute dtype. Biases stay fp32."""
    in_dims, hidden = w1.shape
    out_dims = w3.shape[1]
    in_p, hid_p, out_p = (_round_up(d, 128) for d in (in_dims, hidden, out_dims))

    def pad_w(w, r, c):
        return jnp.pad(w, ((0, r - w.shape[0]), (0, c - w.shape[1]))).astype(compute_dtype)

    def pad_b(b, c):
        return jnp.pad(b.astype(jnp.float32), (0, c - b.shape[0])).reshape(1, c)

    return {
        "w1": pad_w(w1, in_p, hid_p), "b1": pad_b(b1, hid_p),
        "w2": pad_w(w2, hid_p, hid_p), "b2": pad_b(b2, hid_p),
        "w3": pad_w(w3, hid_p, out_p), "b3": pad_b(b3, out_p),
        "in_dims": int(in_dims), "out_dims": int(out_dims),
    }


# -----------------------------------------------------------------------------
# Forward
# -----------------------------------------------------------------------------
@functools.partial(jax.jit, static_argnames=("tile_n", "out_dims", "vmem_limit_bytes"))
def _mlp_forward_impl(x, w1p, b1p, w2p, b2p, w3p, b3p, *,
                      tile_n, out_dims, vmem_limit_bytes):
    n, in_dims = x.shape
    in_p, hid_p = w1p.shape
    out_p = w3p.shape[1]
    cdt = w1p.dtype
    cdt_bytes = jnp.dtype(cdt).itemsize
    n_p = _round_up(n, tile_n)

    # Pad batch/features and cast activations to the compute dtype in one fused
    # op so the kernel streams bf16 tiles (half the x DMA bytes vs fp32).
    # Zero padding is an exact no-op through matmul / bias / ReLU.
    xp = jnp.pad(x, ((0, n_p - n), (0, in_p - in_dims))).astype(cdt)

    grid = (n_p // tile_n,)

    # Loop-invariant operands: resident in VMEM with a single buffer.
    def w_spec(shape):
        return pl.BlockSpec(shape, lambda i: (0, 0), pipeline_mode=pl.Buffered(1))

    cost = pl.CostEstimate(
        flops=int(2 * n_p * (in_p * hid_p + hid_p * hid_p + hid_p * out_p)),
        transcendentals=0,
        bytes_accessed=int(
            n_p * in_p * cdt_bytes
            + (in_p * hid_p + hid_p * hid_p + hid_p * out_p) * cdt_bytes
            + (2 * hid_p + out_p) * 4
            + n_p * out_p * x.dtype.itemsize),
    )

    out = pl.pallas_call(
        _mlp_kernel,
        out_shape=jax.ShapeDtypeStruct((n_p, out_p), x.dtype),
        grid_spec=pltpu.PrefetchScalarGridSpec(
            num_scalar_prefetch=0,
            grid=grid,
            in_specs=[
                pl.BlockSpec((tile_n, in_p), lambda i: (i, 0)),  # x tile (double-buffered)
                w_spec((in_p, hid_p)),                           # W1 (resident)
                w_spec((1, hid_p)),                              # b1
                w_spec((hid_p, hid_p)),                          # W2
                w_spec((1, hid_p)),                              # b2
                w_spec((hid_p, out_p)),                          # W3
                w_spec((1, out_p)),                              # b3
            ],
            out_specs=pl.BlockSpec((tile_n, out_p), lambda i: (i, 0)),
            scratch_shapes=[pltpu.VMEM((tile_n, hid_p), cdt)],   # bf16 hidden scratch
        ),
        compiler_params=pltpu.CompilerParams(
            dimension_semantics=("parallel",),   # row tiles shard across TensorCores
            vmem_limit_bytes=int(vmem_limit_bytes),
        ),
        cost_estimate=cost,
    )(xp, w1p, b1p, w2p, b2p, w3p, b3p)

    return out[:n, :out_dims]


def mlp_forward(x, params, *, tile_n=None):
    """Mlp forward. `params` comes from prepare_mlp_params (padded, bf16 weights)."""
    w1p, b1p = params["w1"], params["b1"]
    w2p, b2p = params["w2"], params["b2"]
    w3p, b3p = params["w3"], params["b3"]
    n = x.shape[0]
    in_p, hid_p = w1p.shape
    out_p = w3p.shape[1]

    budget, limit, force_split = _vmem_plan()
    if tile_n is None:
        tile_n = _choose_tile_n(n, in_p, hid_p, out_p,
                                jnp.dtype(w1p.dtype).itemsize, budget)
        if force_split and n > 16:
            # v7x: 2 TensorCores -> keep the (parallel) row grid at >= 2 steps.
            tile_n = min(tile_n, _round_up(-(-n // 2), 16))
    # bf16 packs 16 sublanes per vreg -> keep the row tile a multiple of 16,
    # and never pad the batch beyond what a single 16-aligned tile needs.
    tile_n = max(16, min(int(tile_n), _round_up(n, 16)))

    return _mlp_forward_impl(x, w1p, b1p, w2p, b2p, w3p, b3p,
                             tile_n=tile_n,
                             out_dims=params["out_dims"],
                             vmem_limit_bytes=int(limit))


# -----------------------------------------------------------------------------
# Init + self-test
# -----------------------------------------------------------------------------
def init_linear_params(key, in_features, out_features, dtype=jnp.float32):
    """Deterministic init mimicking nn.Linear (uniform +/- 1/sqrt(in_features)).
    Stored as (in, out) so the kernel computes x @ W + b."""
    kw, kb = jax.random.split(key)
    bound = 1.0 / (in_features ** 0.5)
    w = jax.random.uniform(kw, (in_features, out_features), dtype,
                           minval=-bound, maxval=bound)
    b = jax.random.uniform(kb, (out_features,), dtype,
                           minval=-bound, maxval=bound)
    return w, b


if __name__ == "__main__":
    # Small shapes consistent with the module (ragged on purpose to exercise padding).
    batch, in_dims, hidden_dims, out_dims = 96, 20, 256, 10

    key = jax.random.PRNGKey(0)
    kx, k1, k2, k3 = jax.random.split(key, 4)

    x = jax.random.normal(kx, (batch, in_dims), jnp.float32)
    w1, b1 = init_linear_params(k1, in_dims, hidden_dims)
    w2, b2 = init_linear_params(k2, hidden_dims, hidden_dims)
    w3, b3 = init_linear_params(k3, hidden_dims, out_dims)

    # Pad + cast weights once (hoisted out of the per-call forward path).
    params = prepare_mlp_params(w1, b1, w2, b2, w3, b3, compute_dtype=jnp.bfloat16)

    out = mlp_forward(x, params)
    out = jax.block_until_ready(out)

    # Pure-JAX reference with the same bf16-inputs / fp32-accumulation structure.
    cdt = jnp.bfloat16

    def dense(a, w, b):
        return jnp.dot(a.astype(cdt), w.astype(cdt),
                       preferred_element_type=jnp.float32) + b.astype(jnp.float32)

    ref = jnp.maximum(dense(x, w1, b1), 0.0)
    ref = jnp.maximum(dense(ref, w2, b2), 0.0)
    ref = dense(ref, w3, b3).astype(x.dtype)   # dropout eval-mode == identity

    assert out.shape == (batch, out_dims), out.shape
    err = float(jnp.max(jnp.abs(out - ref)))
    assert jnp.allclose(out, ref, atol=2e-2, rtol=2e-2), f"max abs err {err}"

    print("KERNEL_OK")
</pallas_src>

<mosaic_0001>
module attributes {stable_mosaic.version = 11 : i64} {
  func.func @_mlp_kernel(%arg0: i32, %arg1: memref<48x128xbf16, #tpu.memory_space<vmem>>, %arg2: memref<128x256xbf16, #tpu.memory_space<vmem>>, %arg3: memref<1x256xf32, #tpu.memory_space<vmem>>, %arg4: memref<256x256xbf16, #tpu.memory_space<vmem>>, %arg5: memref<1x256xf32, #tpu.memory_space<vmem>>, %arg6: memref<256x128xbf16, #tpu.memory_space<vmem>>, %arg7: memref<1x128xf32, #tpu.memory_space<vmem>>, %arg8: memref<48x128xf32, #tpu.memory_space<vmem>>, %arg9: memref<48x256xbf16, #tpu.memory_space<vmem>>) attributes {dimension_semantics = [#tpu.dimension_semantics<parallel>], iteration_bounds = array<i64: 2>, scalar_prefetch = 0 : i64, scratch_operands = 1 : i64, tpu.core_type = #tpu.core_type<tc>, window_params = [{transform_indices = @transform_0, window_bounds = array<i64: 48, 128>}, {pipeline_mode = #tpu.pipeline_mode<synchronous>, transform_indices = @transform_1, window_bounds = array<i64: 128, 256>}, {pipeline_mode = #tpu.pipeline_mode<synchronous>, transform_indices = @transform_2, window_bounds = array<i64: 1, 256>}, {pipeline_mode = #tpu.pipeline_mode<synchronous>, transform_indices = @transform_3, window_bounds = array<i64: 256, 256>}, {pipeline_mode = #tpu.pipeline_mode<synchronous>, transform_indices = @transform_4, window_bounds = array<i64: 1, 256>}, {pipeline_mode = #tpu.pipeline_mode<synchronous>, transform_indices = @transform_5, window_bounds = array<i64: 256, 128>}, {pipeline_mode = #tpu.pipeline_mode<synchronous>, transform_indices = @transform_6, window_bounds = array<i64: 1, 128>}, {transform_indices = @transform_7, window_bounds = array<i64: 48, 128>}]} {
    %c0 = arith.constant 0 : index
    %c0_0 = arith.constant 0 : index
    %0 = vector.load %arg1[%c0, %c0_0] : memref<48x128xbf16, #tpu.memory_space<vmem>>, vector<48x128xbf16>
    %c0_1 = arith.constant 0 : index
    %c0_2 = arith.constant 0 : index
    %1 = vector.load %arg2[%c0_1, %c0_2] : memref<128x256xbf16, #tpu.memory_space<vmem>>, vector<128x256xbf16>
    %cst = arith.constant dense<0.000000e+00> : vector<48x256xf32>
    %2 = tpu.matmul %0, %1, %cst {dimension_numbers = #tpu.dot_dimension_numbers<[1], [0], [0], [1], [0, 0, 1, 1], [], []>} : vector<48x128xbf16>, vector<128x256xbf16>, vector<48x256xf32> -> vector<48x256xf32>
    %c0_3 = arith.constant 0 : index
    %c0_4 = arith.constant 0 : index
    %3 = vector.load %arg3[%c0_3, %c0_4] : memref<1x256xf32, #tpu.memory_space<vmem>>, vector<1x256xf32>
    %4 = vector.broadcast %3 : vector<1x256xf32> to vector<48x256xf32>
    %5 = arith.addf %2, %4 : vector<48x256xf32>
    %cst_5 = arith.constant 0.000000e+00 : f32
    %6 = vector.broadcast %cst_5 : f32 to vector<48x256xf32>
    %7 = arith.maximumf %5, %6 : vector<48x256xf32>
    %8 = arith.truncf %7 : vector<48x256xf32> to vector<48x256xbf16>
    %c0_6 = arith.constant 0 : index
    %c0_7 = arith.constant 0 : index
    %9 = vector.load %arg9[%c0_6, %c0_7] : memref<48x256xbf16, #tpu.memory_space<vmem>>, vector<48x256xbf16>
    tpu.vector_store %arg9[%c0_6, %c0_7], %8 {strides = array<i32>} : memref<48x256xbf16, #tpu.memory_space<vmem>>, vector<48x256xbf16>,
    %c0_8 = arith.constant 0 : index
    %c0_9 = arith.constant 0 : index
    %10 = vector.load %arg9[%c0_8, %c0_9] : memref<48x256xbf16, #tpu.memory_space<vmem>>, vector<48x256xbf16>
    %c0_10 = arith.constant 0 : index
    %c0_11 = arith.constant 0 : index
    %11 = vector.load %arg4[%c0_10, %c0_11] : memref<256x256xbf16, #tpu.memory_space<vmem>>, vector<256x256xbf16>
    %cst_12 = arith.constant dense<0.000000e+00> : vector<48x256xf32>
    %12 = tpu.matmul %10, %11, %cst_12 {dimension_numbers = #tpu.dot_dimension_numbers<[1], [0], [0], [1], [0, 0, 1, 1], [], []>} : vector<48x256xbf16>, vector<256x256xbf16>, vector<48x256xf32> -> vector<48x256xf32>
    %c0_13 = arith.constant 0 : index
    %c0_14 = arith.constant 0 : index
    %13 = vector.load %arg5[%c0_13, %c0_14] : memref<1x256xf32, #tpu.memory_space<vmem>>, vector<1x256xf32>
    %14 = vector.broadcast %13 : vector<1x256xf32> to vector<48x256xf32>
    %15 = arith.addf %12, %14 : vector<48x256xf32>
    %cst_15 = arith.constant 0.000000e+00 : f32
    %16 = vector.broadcast %cst_15 : f32 to vector<48x256xf32>
    %17 = arith.maximumf %15, %16 : vector<48x256xf32>
    %18 = arith.truncf %17 : vector<48x256xf32> to vector<48x256xbf16>
    %c0_16 = arith.constant 0 : index
    %c0_17 = arith.constant 0 : index
    %19 = vector.load %arg9[%c0_16, %c0_17] : memref<48x256xbf16, #tpu.memory_space<vmem>>, vector<48x256xbf16>
    tpu.vector_store %arg9[%c0_16, %c0_17], %18 {strides = array<i32>} : memref<48x256xbf16, #tpu.memory_space<vmem>>, vector<48x256xbf16>,
    %c0_18 = arith.constant 0 : index
    %c0_19 = arith.constant 0 : index
    %20 = vector.load %arg9[%c0_18, %c0_19] : memref<48x256xbf16, #tpu.memory_space<vmem>>, vector<48x256xbf16>
    %c0_20 = arith.constant 0 : index
    %c0_21 = arith.constant 0 : index
    %21 = vector.load %arg6[%c0_20, %c0_21] : memref<256x128xbf16, #tpu.memory_space<vmem>>, vector<256x128xbf16>
    %cst_22 = arith.constant dense<0.000000e+00> : vector<48x128xf32>
    %22 = tpu.matmul %20, %21, %cst_22 {dimension_numbers = #tpu.dot_dimension_numbers<[1], [0], [0], [1], [0, 0, 1, 1], [], []>} : vector<48x256xbf16>, vector<256x128xbf16>, vector<48x128xf32> -> vector<48x128xf32>
    %c0_23 = arith.constant 0 : index
    %c0_24 = arith.constant 0 : index
    %23 = vector.load %arg7[%c0_23, %c0_24] : memref<1x128xf32, #tpu.memory_space<vmem>>, vector<1x128xf32>
    %24 = vector.broadcast %23 : vector<1x128xf32> to vector<48x128xf32>
    %25 = arith.addf %22, %24 : vector<48x128xf32>
    %c0_25 = arith.constant 0 : index
    %c0_26 = arith.constant 0 : index
    %26 = vector.load %arg8[%c0_25, %c0_26] : memref<48x128xf32, #tpu.memory_space<vmem>>, vector<48x128xf32>
    tpu.vector_store %arg8[%c0_25, %c0_26], %25 {strides = array<i32>} : memref<48x128xf32, #tpu.memory_space<vmem>>, vector<48x128xf32>,
    return
  }
  func.func @transform_0(%arg0: i32) -> (i32, i32) {
    %c0_i32 = arith.constant 0 : i32
    %c0_i32_0 = arith.constant 0 : i32
    return %arg0, %c0_i32 : i32, i32
  }
  func.func @transform_1(%arg0: i32) -> (i32, i32) {
    %c0_i32 = arith.constant 0 : i32
    %c0_i32_0 = arith.constant 0 : i32
    %c0_i32_1 = arith.constant 0 : i32
    return %c0_i32, %c0_i32_0 : i32, i32
  }
  func.func @transform_2(%arg0: i32) -> (i32, i32) {
    %c0_i32 = arith.constant 0 : i32
    %c0_i32_0 = arith.constant 0 : i32
    %c0_i32_1 = arith.constant 0 : i32
    return %c0_i32, %c0_i32_0 : i32, i32
  }
  func.func @transform_3(%arg0: i32) -> (i32, i32) {
    %c0_i32 = arith.constant 0 : i32
    %c0_i32_0 = arith.constant 0 : i32
    %c0_i32_1 = arith.constant 0 : i32
    return %c0_i32, %c0_i32_0 : i32, i32
  }
  func.func @transform_4(%arg0: i32) -> (i32, i32) {
    %c0_i32 = arith.constant 0 : i32
    %c0_i32_0 = arith.constant 0 : i32
    %c0_i32_1 = arith.constant 0 : i32
    return %c0_i32, %c0_i32_0 : i32, i32
  }
  func.func @transform_5(%arg0: i32) -> (i32, i32) {
    %c0_i32 = arith.constant 0 : i32
    %c0_i32_0 = arith.constant 0 : i32
    %c0_i32_1 = arith.constant 0 : i32
    return %c0_i32, %c0_i32_0 : i32, i32
  }
  func.func @transform_6(%arg0: i32) -> (i32, i32) {
    %c0_i32 = arith.constant 0 : i32
    %c0_i32_0 = arith.constant 0 : i32
    %c0_i32_1 = arith.constant 0 : i32
    return %c0_i32, %c0_i32_0 : i32, i32
  }
  func.func @transform_7(%arg0: i32) -> (i32, i32) {
    %c0_i32 = arith.constant 0 : i32
    %c0_i32_0 = arith.constant 0 : i32
    return %arg0, %c0_i32 : i32, i32
  }
}

</mosaic_0001>

<llo_original>
// kernel: _mlp_forward_impl.1
$region0: #{_mlp_forward_impl.1}
  #allocation0 [shape = 'u32[]', space=smem, size = 0x4, offset = 0x4, fixed_abs, tag = 'smem constant byte address 0x4 - core index']
  #allocation1 [shape = 'u32[144,128]{1,0:T(1,128)}', space=vmem, size = 0x12000, scoped, tag = 'internal scratch']
  #allocation2 [shape = 'bf16[48,256]{1,0:T(8,128)(2,1)}', space=vmem, size = 0x6000, scoped, tag = 'scratch operand']
  %s0 = inlined_call_operand.vmem [shape: bf16[96,128], index: 0, kind: input, shape index: {}]
  %s1 = inlined_call_operand.vmem [shape: bf16[128,256], index: 1, kind: input, shape index: {}]
  %s2 = inlined_call_operand.vmem [shape: f32[1,256], index: 2, kind: input, shape index: {}]
  %s3 = inlined_call_operand.hbm [shape: bf16[256,256], index: 3, kind: input, shape index: {}]
  %s4 = inlined_call_operand.vmem [shape: f32[1,256], index: 4, kind: input, shape index: {}]
  %s5 = inlined_call_operand.hbm [shape: bf16[256,128], index: 5, kind: input, shape index: {}]
  %s6 = inlined_call_operand.vmem [shape: f32[1,128], index: 6, kind: input, shape index: {}]
  %s7 = inlined_call_operand.vmem [shape: f32[96,128], index: 7, kind: output, shape index: {}]
  %s8 = sld [smem:[#allocation0]]
  $region69: #{_mlp_forward_impl.1} parent=0
    _
  %s10 = ssub.s32 1, %s8
  %s11 = scalar_select 0, %s10, %s8
  $region1: #{_mlp_forward_impl.1} parent=0
    #allocation3 [shape = 'u8[131072]{0}', space=vmem, size = 0x20000, scoped, tag = 'input window, operand 3, single buffered']
    #allocation4 [shape = 's32[2]{0}', space=sflag, size = 0x8, scoped, tag = 'scoped memory for _mlp_forward_impl.1']
    #allocation5 [shape = 'u8[65536]{0}', space=vmem, size = 0x10000, scoped, tag = 'input window, operand 5, single buffered']
    #allocation6 [shape = 's32[1]{0}', space=sflag, size = 0x4, scoped, tag = 'scoped memory for _mlp_forward_impl.1']
    %12 = vsyncpa [#allocation4], 0
    %13 = vsyncpa [#allocation6], 0
    loop: start=0, step=1, limit=4
    $region2: #{_mlp_forward_impl.1} parent=1 // loop_pre_header
      _
    $region3: #{_mlp_forward_impl.1} parent=1 // loop_header
      %s15 = sphi 0, %s19
      %p16 = scmp.ge.s32.totalorder %s15, 4
      %s25 = sphi 0, %s27
      %s28 = sphi 0, %s25
      %s29 = sphi 0, %s28
      %s45 = sphi 0, %s29
      %s49 = sphi 0, %s49
      %s51 = sphi 0, %s49
      %s52 = sphi 0, %s51
      %s66 = sphi 0, %s52
      %s70 = sphi 0, %s70
      %s72 = sphi 0, %s70
      %s73 = sphi 0, %s72
      %s87 = sphi 0, %s73
      %s91 = sphi 0, %s91
      %s93 = sphi 0, %s91
      %s94 = sphi 0, %s93
      %s108 = sphi 0, %s94
      %s112 = sphi 0, %s112
      %s114 = sphi 0, %s112
      %s115 = sphi 0, %s114
      %s129 = sphi 0, %s115
      %s133 = sphi 0, %s133
      %s135 = sphi 0, %s133
      %s136 = sphi 0, %s135
      %s150 = sphi 0, %s136
      %s154 = sphi 0, %s154
      %s156 = sphi 0, %s154
      %s157 = sphi 0, %s156
      %s171 = sphi 0, %s157
      %s177 = sphi 0, %s179
      %s180 = sphi 0, %s177
      %s181 = sphi 0, %s180
      %s197 = sphi 0, %s181
    $region4: #{_mlp_forward_impl.1} parent=1 // loop_header_branch
      %18 = sbr.rel (%p16) target = $region8
    $region5: #{_mlp_forward_impl.1} parent=1 // loop_body
      %s20 = ssub.s32 %s15, 1
      %s21 = ssub.s32 %s15, 2
      %s22 = sadd.s32 %s15, 1
      %s23 = ssub.s32 %s15, %s22
      %p24 = scmp.eq.s32.totalorder %s23, 0
      %s26 = sadd.s32 %s25, 1
      %s27 = scalar_select %p24, %s25, %s26
      %p30 = pneg %p24
      %p31 = scmp.eq.s32.totalorder %s15, 1
      %p32 = por %p30, %p31
      %p33 = scmp.ne.s32.totalorder %s25, %s28
      %p34 = scmp.eq.s32.totalorder %s15, 0
      %p35 = por %p33, %p34
      %p36 = scmp.ne.s32.totalorder %s25, %s28
      %p37 = scmp.eq.s32.totalorder %s20, 1
      %p38 = por %p36, %p37
      %p39 = scmp.ne.s32.totalorder %s28, %s29
      %p40 = scmp.eq.s32.totalorder %s20, 0
      %p41 = por %p39, %p40
      %p42 = scmp.ne.s32.totalorder %s28, %s29
      %p43 = scmp.eq.s32.totalorder %s21, 1
      %p44 = por %p42, %p43
      %p46 = scmp.ne.s32.totalorder %s29, %s45
      %p47 = scmp.eq.s32.totalorder %s21, 0
      %p48 = por %p46, %p47
      %s50 = sadd.s32 %s49, 1
      %p53 = scmp.eq.s32.totalorder %s15, 1
      %p54 = scmp.ne.s32.totalorder %s49, %s51
      %p55 = scmp.eq.s32.totalorder %s15, 0
      %p56 = por %p54, %p55
      %p57 = scmp.ne.s32.totalorder %s49, %s51
      %p58 = scmp.eq.s32.totalorder %s20, 1
      %p59 = por %p57, %p58
      %p60 = scmp.ne.s32.totalorder %s51, %s52
      %p61 = scmp.eq.s32.totalorder %s20, 0
      %p62 = por %p60, %p61
      %p63 = scmp.ne.s32.totalorder %s51, %s52
      %p64 = scmp.eq.s32.totalorder %s21, 1
      %p65 = por %p63, %p64
      %p67 = scmp.ne.s32.totalorder %s52, %s66
      %p68 = scmp.eq.s32.totalorder %s21, 0
      %p69 = por %p67, %p68
      %s71 = sadd.s32 %s70, 1
      %p74 = scmp.eq.s32.totalorder %s15, 1
      %p75 = scmp.ne.s32.totalorder %s70, %s72
      %p76 = scmp.eq.s32.totalorder %s15, 0
      %p77 = por %p75, %p76
      %p78 = scmp.ne.s32.totalorder %s70, %s72
      %p79 = scmp.eq.s32.totalorder %s20, 1
      %p80 = por %p78, %p79
      %p81 = scmp.ne.s32.totalorder %s72, %s73
      %p82 = scmp.eq.s32.totalorder %s20, 0
      %p83 = por %p81, %p82
      %p84 = scmp.ne.s32.totalorder %s72, %s73
      %p85 = scmp.eq.s32.totalorder %s21, 1
      %p86 = por %p84, %p85
      %p88 = scmp.ne.s32.totalorder %s73, %s87
      %p89 = scmp.eq.s32.totalorder %s21, 0
      %p90 = por %p88, %p89
      %s92 = sadd.s32 %s91, 1
      %p95 = scmp.eq.s32.totalorder %s15, 1
      %p96 = scmp.ne.s32.totalorder %s91, %s93
      %p97 = scmp.eq.s32.totalorder %s15, 0
      %p98 = por %p96, %p97
      %p99 = scmp.ne.s32.totalorder %s91, %s93
      %p100 = scmp.eq.s32.totalorder %s20, 1
      %p101 = por %p99, %p100
      %p102 = scmp.ne.s32.totalorder %s93, %s94
      %p103 = scmp.eq.s32.totalorder %s20, 0
      %p104 = por %p102, %p103
      %p105 = scmp.ne.s32.totalorder %s93, %s94
      %p106 = scmp.eq.s32.totalorder %s21, 1
      %p107 = por %p105, %p106
      %p109 = scmp.ne.s32.totalorder %s94, %s108
      %p110 = scmp.eq.s32.totalorder %s21, 0
      %p111 = por %p109, %p110
      %s113 = sadd.s32 %s112, 1
      %p116 = scmp.eq.s32.totalorder %s15, 1
      %p117 = scmp.ne.s32.totalorder %s112, %s114
      %p118 = scmp.eq.s32.totalorder %s15, 0
      %p119 = por %p117, %p118
      %p120 = scmp.ne.s32.totalorder %s112, %s114
      %p121 = scmp.eq.s32.totalorder %s20, 1
      %p122 = por %p120, %p121
      %p123 = scmp.ne.s32.totalorder %s114, %s115
      %p124 = scmp.eq.s32.totalorder %s20, 0
      %p125 = por %p123, %p124
      %p126 = scmp.ne.s32.totalorder %s114, %s115
      %p127 = scmp.eq.s32.totalorder %s21, 1
      %p128 = por %p126, %p127
      %p130 = scmp.ne.s32.totalorder %s115, %s129
      %p131 = scmp.eq.s32.totalorder %s21, 0
      %p132 = por %p130, %p131
      %s134 = sadd.s32 %s133, 1
      %p137 = scmp.eq.s32.totalorder %s15, 1
      %p138 = scmp.ne.s32.totalorder %s133, %s135
      %p139 = scmp.eq.s32.totalorder %s15, 0
      %p140 = por %p138, %p139
      %p141 = scmp.ne.s32.totalorder %s133, %s135
      %p142 = scmp.eq.s32.totalorder %s20, 1
      %p143 = por %p141, %p142
      %p144 = scmp.ne.s32.totalorder %s135, %s136
      %p145 = scmp.eq.s32.totalorder %s20, 0
      %p146 = por %p144, %p145
      %p147 = scmp.ne.s32.totalorder %s135, %s136
      %p148 = scmp.eq.s32.totalorder %s21, 1
      %p149 = por %p147, %p148
      %p151 = scmp.ne.s32.totalorder %s136, %s150
      %p152 = scmp.eq.s32.totalorder %s21, 0
      %p153 = por %p151, %p152
      %s155 = sadd.s32 %s154, 1
      %p158 = scmp.eq.s32.totalorder %s15, 1
      %p159 = scmp.ne.s32.totalorder %s154, %s156
      %p160 = scmp.eq.s32.totalorder %s15, 0
      %p161 = por %p159, %p160
      %p162 = scmp.ne.s32.totalorder %s154, %s156
      %p163 = scmp.eq.s32.totalorder %s20, 1
      %p164 = por %p162, %p163
      %p165 = scmp.ne.s32.totalorder %s156, %s157
      %p166 = scmp.eq.s32.totalorder %s20, 0
      %p167 = por %p165, %p166
      %p168 = scmp.ne.s32.totalorder %s156, %s157
      %p169 = scmp.eq.s32.totalorder %s21, 1
      %p170 = por %p168, %p169
      %p172 = scmp.ne.s32.totalorder %s157, %s171
      %p173 = scmp.eq.s32.totalorder %s21, 0
      %p174 = por %p172, %p173
      %s175 = ssub.s32 %s15, %s22
      %p176 = scmp.eq.s32.totalorder %s175, 0
      %s178 = sadd.s32 %s177, 1
      %s179 = scalar_select %p176, %s177, %s178
      %p182 = pneg %p176
      %p183 = scmp.eq.s32.totalorder %s15, 1
      %p184 = por %p182, %p183
      %p185 = scmp.ne.s32.totalorder %s177, %s180
      %p186 = scmp.eq.s32.totalorder %s15, 0
      %p187 = por %p185, %p186
      %p188 = scmp.ne.s32.totalorder %s177, %s180
      %p189 = scmp.eq.s32.totalorder %s20, 1
      %p190 = por %p188, %p189
      %p191 = scmp.ne.s32.totalorder %s180, %s181
      %p192 = scmp.eq.s32.totalorder %s20, 0
      %p193 = por %p191, %p192
      %p194 = scmp.ne.s32.totalorder %s180, %s181
      %p195 = scmp.eq.s32.totalorder %s21, 1
      %p196 = por %p194, %p195
      %p198 = scmp.ne.s32.totalorder %s181, %s197
      %p199 = scmp.eq.s32.totalorder %s21, 0
      %p200 = por %p198, %p199
      %p201 = scmp.le.s32.totalorder 1, %s15
      %p202 = scmp.lt.s32.totalorder %s15, 3
      %p203 = pnand %p201, %p202
      %p204 = pneg %p203
      // Predicated region
      $region9: #{_mlp_forward_impl.1} parent=5 // pred_check
        _
      $region10: #{_mlp_forward_impl.1} parent=5 // pred_check_branch
        %206 = sbr.rel (%p203) target = $region12
      $region11: #{_mlp_forward_impl.1} parent=5 // pred_region
        %s207 = ssub.s32 %s15, 1
        // Predicated region
        $region13: #{_mlp_forward_impl.1} parent=11 // pred_check
          %p208 = pneg %p62
        $region14: #{_mlp_forward_impl.1} parent=11 // pred_check_branch
          %210 = sbr.rel (%p208) target = $region16
        $region15: #{_mlp_forward_impl.1} parent=11 // pred_region
          _
        $region16: #{_mlp_forward_impl.1} parent=11 // pred_fallthru
          _
        // Predicated region
        $region17: #{_mlp_forward_impl.1} parent=11 // pred_check
          %p211 = pneg %p83
        $region18: #{_mlp_forward_impl.1} parent=11 // pred_check_branch
          %213 = sbr.rel (%p211) target = $region20
        $region19: #{_mlp_forward_impl.1} parent=11 // pred_region
          _
        $region20: #{_mlp_forward_impl.1} parent=11 // pred_fallthru
          _
        // Predicated region
        $region21: #{_mlp_forward_impl.1} parent=11 // pred_check
          %p214 = pneg %p104
        $region22: #{_mlp_forward_impl.1} parent=11 // pred_check_branch
          %216 = sbr.rel (%p214) target = $region24
        $region23: #{_mlp_forward_impl.1} parent=11 // pred_region
          %s218 = ssub.s32 4096, 4096
          %219 = vsyncadd [#allocation4], %s218
          %s220 = sshll.u32 [#allocation3], 4
          %s221 = int_to_ptr.vmem [resolvable:$true] %s220
          %226 = dma.hbm_to_vmem [thread:$0]  %s3, 4096, %s221, [#allocation4], 128, 128, 8
        $region24: #{_mlp_forward_impl.1} parent=11 // pred_fallthru
          _
        // Predicated region
        $region25: #{_mlp_forward_impl.1} parent=11 // pred_check
          %p227 = pneg %p125
        $region26: #{_mlp_forward_impl.1} parent=11 // pred_check_branch
          %229 = sbr.rel (%p227) target = $region28
        $region27: #{_mlp_forward_impl.1} parent=11 // pred_region
          _
        $region28: #{_mlp_forward_impl.1} parent=11 // pred_fallthru
          _
        // Predicated region
        $region29: #{_mlp_forward_impl.1} parent=11 // pred_check
          %p230 = pneg %p146
        $region30: #{_mlp_forward_impl.1} parent=11 // pred_check_branch
          %232 = sbr.rel (%p230) target = $region32
        $region31: #{_mlp_forward_impl.1} parent=11 // pred_region
          %s234 = ssub.s32 2048, 2048
          %235 = vsyncadd [#allocation6], %s234
          %s236 = sshll.u32 [#allocation5], 4
          %s237 = int_to_ptr.vmem [resolvable:$true] %s236
          %242 = dma.hbm_to_vmem [thread:$0]  %s5, 2048, %s237, [#allocation6], 64, 64, 4
        $region32: #{_mlp_forward_impl.1} parent=11 // pred_fallthru
          _
        // Predicated region
        $region33: #{_mlp_forward_impl.1} parent=11 // pred_check
          %p243 = pneg %p167
        $region34: #{_mlp_forward_impl.1} parent=11 // pred_check_branch
          %245 = sbr.rel (%p243) target = $region36
        $region35: #{_mlp_forward_impl.1} parent=11 // pred_region
          _
        $region36: #{_mlp_forward_impl.1} parent=11 // pred_fallthru
          _
      $region12: #{_mlp_forward_impl.1} parent=5 // pred_fallthru
        _
      %p246 = scmp.lt.s32.totalorder %s15, 2
      // Predicated region
      $region37: #{_mlp_forward_impl.1} parent=5 // pred_check
        %p247 = pneg %p246
      $region38: #{_mlp_forward_impl.1} parent=5 // pred_check_branch
        %249 = sbr.rel (%p247) target = $region40
      $region39: #{_mlp_forward_impl.1} parent=5 // pred_region
        // Predicated region
        $region41: #{_mlp_forward_impl.1} parent=39 // pred_check
          %p250 = pneg %p35
        $region42: #{_mlp_forward_impl.1} parent=39 // pred_check_branch
          %252 = sbr.rel (%p250) target = $region44
        $region43: #{_mlp_forward_impl.1} parent=39 // pred_region
          %s253 = smul.u32 6, %s15
          %p254 = scmp.lt.s32.totalorder %s253, 11
          %s255 = scalar_select %p254, %s253, 11
          %s256 = smul.addr %s255, 4
          %s257 = scalar_lea.vmem %s0, %s256
          %s258 = smul.u32 6, %s15
        $region44: #{_mlp_forward_impl.1} parent=39 // pred_fallthru
          _
      $region40: #{_mlp_forward_impl.1} parent=5 // pred_fallthru
        _
      %p259 = scmp.le.s32.totalorder 1, %s15
      %p260 = scmp.lt.s32.totalorder %s15, 3
      %p261 = pnand %p259, %p260
      %p262 = pneg %p261
      // Predicated region
      $region45: #{_mlp_forward_impl.1} parent=5 // pred_check
        _
      $region46: #{_mlp_forward_impl.1} parent=5 // pred_check_branch
        %264 = sbr.rel (%p261) target = $region48
      $region47: #{_mlp_forward_impl.1} parent=5 // pred_region
        %s265 = ssub.s32 %s15, 1
        // Predicated region
        $region49: #{_mlp_forward_impl.1} parent=47 // pred_check
          %p266 = pneg %p104
        $region50: #{_mlp_forward_impl.1} parent=47 // pred_check_branch
          %268 = sbr.rel (%p266) target = $region52
        $region51: #{_mlp_forward_impl.1} parent=47 // pred_region
          %269 = dma.done [#allocation4], 4096
        $region52: #{_mlp_forward_impl.1} parent=47 // pred_fallthru
          _
        // Predicated region
        $region53: #{_mlp_forward_impl.1} parent=47 // pred_check
          %p270 = pneg %p146
        $region54: #{_mlp_forward_impl.1} parent=47 // pred_check_branch
          %272 = sbr.rel (%p270) target = $region56
        $region55: #{_mlp_forward_impl.1} parent=47 // pred_region
          %273 = dma.done [#allocation6], 2048
        $region56: #{_mlp_forward_impl.1} parent=47 // pred_fallthru
          _
        %s274 = smul.u32 6, %s20
        %p275 = scmp.lt.s32.totalorder %s274, 11
        %s276 = scalar_select %p275, %s274, 11
        %s277 = smul.addr %s276, 4
        %s278 = scalar_lea.vmem %s0, %s277
        %p279 = pneg %p41
        %p280 = pneg %p38
        %p281 = pneg %p62
        %p282 = pneg %p59
        %p283 = pneg %p83
        %p284 = pneg %p80
        %p285 = pneg %p104
        %p286 = pneg %p101
        %p287 = pneg %p125
        %p288 = pneg %p122
        %p289 = pneg %p146
        %p290 = pneg %p143
        %p291 = pneg %p167
        %p292 = pneg %p164
        %p293 = pneg %p193
        %p294 = pneg %p190
        %s295 = smul.u32 6, %s20
        %p296 = scmp.lt.s32.totalorder %s295, 11
        %s297 = scalar_select %p296, %s295, 11
        %s298 = smul.addr %s297, 8
        %s299 = scalar_lea.vmem %s7, %s298
        %s300 = smul.u32 6, %s20
        %p301 = scmp.lt.s32.totalorder %s300, 11
        %s302 = scalar_select %p301, %s300, 11
        %s303 = smul.addr %s302, 4
        %s304 = scalar_lea.vmem %s0, %s303
        %s305 = smul.u32 6, %s20
        %s306 = smul.u32 6, %s20
        %p307 = scmp.lt.s32.totalorder %s306, 11
        %s308 = scalar_select %p307, %s306, 11
        %s309 = smul.addr %s308, 8
        %s310 = scalar_lea.vmem %s7, %s309
        %s311 = smul.u32 6, %s20
        %v313 = vld [vmem:[%s304] sm:$0xf]
        %v314 = vld [vmem:[%s304 + $0x4] sm:$0xf]
        %v315 = vld [vmem:[%s304 + $0x8] sm:$0xf]
        %v316 = vld [vmem:[%s304 + $0xc] sm:$0xf]
        %v317 = vld [vmem:[%s304 + $0x10] sm:$0xf]
        %v318 = vld [vmem:[%s304 + $0x14] sm:$0xf]
        %v319 = vld [vmem:[%s1] sm:$0xff]
        %v320 = vld [vmem:[%s1 + $0x8] sm:$0xff]
        %v321 = vld [vmem:[%s1 + $0x10] sm:$0xff]
        %v322 = vld [vmem:[%s1 + $0x18] sm:$0xff]
        %v323 = vld [vmem:[%s1 + $0x20] sm:$0xff]
        %v324 = vld [vmem:[%s1 + $0x28] sm:$0xff]
        %v325 = vld [vmem:[%s1 + $0x30] sm:$0xff]
        %v326 = vld [vmem:[%s1 + $0x38] sm:$0xff]
        %v327 = vld [vmem:[%s1 + $0x40] sm:$0xff]
        %v328 = vld [vmem:[%s1 + $0x48] sm:$0xff]
        %v329 = vld [vmem:[%s1 + $0x50] sm:$0xff]
        %v330 = vld [vmem:[%s1 + $0x58] sm:$0xff]
        %v331 = vld [vmem:[%s1 + $0x60] sm:$0xff]
        %v332 = vld [vmem:[%s1 + $0x68] sm:$0xff]
        %v333 = vld [vmem:[%s1 + $0x70] sm:$0xff]
        %v334 = vld [vmem:[%s1 + $0x78] sm:$0xff]
        %v335 = vld [vmem:[%s2] sm:$0x3]
        %v337 = vlaneseq
        %v338 = vshrl.u32 %v337, 7
        %v339 = vsub.s32 0, %v338
        %v340 = vrot.slane %v335, %v339
        %v341 = vlaneseq
        %v342 = vshrl.u32 %v341, 7
        %v343 = vsub.s32 1, %v342
        %v344 = vrot.slane %v335, %v343
        %v353 = vunpack.c.l.b16 %v313
        %v354 = vunpack.c.l.b16 %v314
        %v355 = vunpack.c.l.b16 %v315
        %v356 = vunpack.c.l.b16 %v316
        %v357 = vunpack.c.l.b16 %v317
        %v358 = vunpack.c.l.b16 %v318
        %v359 = vpack.c.b16 %v354, %v353
        %v360 = vpack.c.b16 %v356, %v355
        %v361 = vpack.c.b16 %v358, %v357
        %v381 = vunpack.c.l.b16 %v319
        %v382 = vunpack.c.h.b16 %v319
        %v383 = vunpack.c.l.b16 %v320
        %v384 = vunpack.c.h.b16 %v320
        %v385 = vunpack.c.l.b16 %v321
        %v386 = vunpack.c.h.b16 %v321
        %v387 = vunpack.c.l.b16 %v322
        %v388 = vunpack.c.h.b16 %v322
        %v389 = vunpack.c.l.b16 %v323
        %v390 = vunpack.c.h.b16 %v323
        %v391 = vunpack.c.l.b16 %v324
        %v392 = vunpack.c.h.b16 %v324
        %v393 = vunpack.c.l.b16 %v325
        %v394 = vunpack.c.h.b16 %v325
        %v395 = vunpack.c.l.b16 %v326
        %v396 = vunpack.c.h.b16 %v326
        %v397 = vunpack.c.l.b16 %v327
        %v398 = vunpack.c.h.b16 %v327
        %v399 = vunpack.c.l.b16 %v328
        %v400 = vunpack.c.h.b16 %v328
        %v401 = vunpack.c.l.b16 %v329
        %v402 = vunpack.c.h.b16 %v329
        %v403 = vunpack.c.l.b16 %v330
        %v404 = vunpack.c.h.b16 %v330
        %v405 = vunpack.c.l.b16 %v331
        %v406 = vunpack.c.h.b16 %v331
        %v407 = vunpack.c.l.b16 %v332
        %v408 = vunpack.c.h.b16 %v332
        %v409 = vunpack.c.l.b16 %v333
        %v410 = vunpack.c.h.b16 %v333
        %v411 = vunpack.c.l.b16 %v334
        %v412 = vunpack.c.h.b16 %v334
        %v413 = vpack.c.b16 %v383, %v381
        %v414 = vpack.c.b16 %v384, %v382
        %v415 = vpack.c.b16 %v387, %v385
        %v416 = vpack.c.b16 %v388, %v386
        %v417 = vpack.c.b16 %v391, %v389
        %v418 = vpack.c.b16 %v392, %v390
        %v419 = vpack.c.b16 %v395, %v393
        %v420 = vpack.c.b16 %v396, %v394
        %v421 = vpack.c.b16 %v399, %v397
        %v422 = vpack.c.b16 %v400, %v398
        %v423 = vpack.c.b16 %v403, %v401
        %v424 = vpack.c.b16 %v404, %v402
        %v425 = vpack.c.b16 %v407, %v405
        %v426 = vpack.c.b16 %v408, %v406
        %v427 = vpack.c.b16 %v411, %v409
        %v428 = vpack.c.b16 %v412, %v410
        %445 = vmatprep.subr.bf16.mxu0 %v428
        %446 = vmatpush1.bf16.msra.mxu0 %v427
        %447 = vmatprep.subr.bf16.mxu0 %v426
        %448 = vmatpush1.bf16.msra.mxu0 %v425
        %449 = vmatprep.subr.bf16.mxu0 %v424
        %450 = vmatpush1.bf16.msra.mxu0 %v423
        %451 = vmatprep.subr.bf16.mxu0 %v422
        %452 = vmatpush1.bf16.msra.mxu0 %v421
        %453 = vmatprep.subr.bf16.mxu0 %v420
        %454 = vmatpush1.bf16.msra.mxu0 %v419
        %455 = vmatprep.subr.bf16.mxu0 %v418
        %456 = vmatpush1.bf16.msra.mxu0 %v417
        %457 = vmatprep.subr.bf16.mxu0 %v416
        %458 = vmatpush1.bf16.msra.mxu0 %v415
        %459 = vmatprep.subr.bf16.mxu0 %v414
        %460 = vmatpush1.bf16.msra.mxu0 %v413
        %461 = vmatprep.subr.bf16.mxu0 0
        %462 = vmatpush2.bf16.msra.mxu0 0
        %463 = vmatprep.subr.bf16.mxu0 0
        %464 = vmatpush2.bf16.msra.mxu0 0
        %465 = vmatprep.subr.bf16.mxu0 0
        %466 = vmatpush2.bf16.msra.mxu0 0
        %467 = vmatprep.subr.bf16.mxu0 0
        %468 = vmatpush2.bf16.msra.mxu0 0
        %469 = vmatprep.subr.bf16.mxu0 0
        %470 = vmatpush2.bf16.msra.mxu0 0
        %471 = vmatprep.subr.bf16.mxu0 0
        %472 = vmatpush2.bf16.msra.mxu0 0
        %473 = vmatprep.subr.bf16.mxu0 0
        %474 = vmatpush2.bf16.msra.mxu0 0
        %475 = vmatprep.subr.bf16.mxu0 0
        %476 = vmatpush2.bf16.msra.mxu0 0
        %477 = vmatprep.mubr.bf16.mxu0 0
        %478 = vmatmul.mubr.bf16.gmra.mxu0 %v359
        %v479 = vpop.f32.mrf.mxu0
        %v480 = vadd.f32 %v340, %v479
        %v481 = vpop.f32.mrf.mxu0
        %v482 = vadd.f32 %v344, %v481
        %v483 = vpop.f32.mrf.mxu0
        %v484 = vadd.f32 %v340, %v483
        %v485 = vpop.f32.mrf.mxu0
        %v486 = vadd.f32 %v344, %v485
        %487 = vmatprep.mubr.bf16.mxu0 0
        %488 = vmatmul.mubr.bf16.gmra.mxu0 %v360
        %v489 = vpop.f32.mrf.mxu0
        %v490 = vadd.f32 %v340, %v489
        %v491 = vpop.f32.mrf.mxu0
        %v492 = vadd.f32 %v344, %v491
        %v493 = vpop.f32.mrf.mxu0
        %v494 = vadd.f32 %v340, %v493
        %v495 = vpop.f32.mrf.mxu0
        %v496 = vadd.f32 %v344, %v495
        %497 = vmatprep.mubr.bf16.mxu0 0
        %498 = vmatmul.mubr.bf16.gmra.mxu0 %v361
        %v499 = vpop.f32.mrf.mxu0
        %v500 = vadd.f32 %v340, %v499
        %v501 = vpop.f32.mrf.mxu0
        %v502 = vadd.f32 %v344, %v501
        %v503 = vpop.f32.mrf.mxu0
        %v504 = vadd.f32 %v340, %v503
        %v505 = vpop.f32.mrf.mxu0
        %v506 = vadd.f32 %v344, %v505
        %507 = vdwg.mxu0
        %v508 = vmax.f32 %v480, 0.0
        %v509 = vmax.f32 %v482, 0.0
        %v510 = vmax.f32 %v484, 0.0
        %v511 = vmax.f32 %v486, 0.0
        %v512 = vmax.f32 %v490, 0.0
        %v513 = vmax.f32 %v492, 0.0
        %v514 = vmax.f32 %v494, 0.0
        %v515 = vmax.f32 %v496, 0.0
        %v516 = vmax.f32 %v500, 0.0
        %v517 = vmax.f32 %v502, 0.0
        %v518 = vmax.f32 %v504, 0.0
        %v519 = vmax.f32 %v506, 0.0
        %v520 = vpack.c.bf16 %v510, %v508
        %v521 = vpack.c.bf16 %v511, %v509
        %v522 = vpack.c.bf16 %v514, %v512
        %v523 = vpack.c.bf16 %v515, %v513
        %v524 = vpack.c.bf16 %v518, %v516
        %v525 = vpack.c.bf16 %v519, %v517
        %v532 = vunpack.c.l.b16 %v520
        %v533 = vunpack.c.l.b16 %v521
        %v534 = vunpack.c.h.b16 %v520
        %v535 = vunpack.c.h.b16 %v521
        %v536 = vunpack.c.l.b16 %v522
        %v537 = vunpack.c.l.b16 %v523
        %v538 = vunpack.c.h.b16 %v522
        %v539 = vunpack.c.h.b16 %v523
        %v540 = vunpack.c.l.b16 %v524
        %v541 = vunpack.c.l.b16 %v525
        %v542 = vunpack.c.h.b16 %v524
        %v543 = vunpack.c.h.b16 %v525
        %v544 = vpack.c.b16 %v533, %v532
        %v545 = vpack.c.b16 %v535, %v534
        %v546 = vpack.c.b16 %v537, %v536
        %v547 = vpack.c.b16 %v539, %v538
        %v548 = vpack.c.b16 %v541, %v540
        %v549 = vpack.c.b16 %v543, %v542
        %556 = vst [vmem:[#allocation2] sm:$0xff] %v544
        %557 = vst [vmem:[#allocation2 + $0x8] sm:$0xff] %v545
        %558 = vst [vmem:[#allocation2 + $0x10] sm:$0xff] %v546
        %559 = vst [vmem:[#allocation2 + $0x18] sm:$0xff] %v547
        %560 = vst [vmem:[#allocation2 + $0x20] sm:$0xff] %v548
        %561 = vst [vmem:[#allocation2 + $0x28] sm:$0xff] %v549
        %v562 = vld [vmem:[#allocation2] sm:$0xff]
        %v563 = vld [vmem:[#allocation2 + $0x8] sm:$0xff]
        %v564 = vld [vmem:[#allocation2 + $0x10] sm:$0xff]
        %v565 = vld [vmem:[#allocation2 + $0x18] sm:$0xff]
        %v566 = vld [vmem:[#allocation2 + $0x20] sm:$0xff]
        %v567 = vld [vmem:[#allocation2 + $0x28] sm:$0xff]
        %v568 = vld [vmem:[#allocation3] sm:$0xff]
        %v569 = vld [vmem:[#allocation3 + $0x8] sm:$0xff]
        %v570 = vld [vmem:[#allocation3 + $0x10] sm:$0xff]
        %v571 = vld [vmem:[#allocation3 + $0x18] sm:$0xff]
        %v572 = vld [vmem:[#allocation3 + $0x20] sm:$0xff]
        %v573 = vld [vmem:[#allocation3 + $0x28] sm:$0xff]
        %v574 = vld [vmem:[#allocation3 + $0x30] sm:$0xff]
        %v575 = vld [vmem:[#allocation3 + $0x38] sm:$0xff]
        %v576 = vld [vmem:[#allocation3 + $0x40] sm:$0xff]
        %v577 = vld [vmem:[#allocation3 + $0x48] sm:$0xff]
        %v578 = vld [vmem:[#allocation3 + $0x50] sm:$0xff]
        %v579 = vld [vmem:[#allocation3 + $0x58] sm:$0xff]
        %v580 = vld [vmem:[#allocation3 + $0x60] sm:$0xff]
        %v581 = vld [vmem:[#allocation3 + $0x68] sm:$0xff]
        %v582 = vld [vmem:[#allocation3 + $0x70] sm:$0xff]
        %v583 = vld [vmem:[#allocation3 + $0x78] sm:$0xff]
        %v584 = vld [vmem:[#allocation3 + $0x80] sm:$0xff]
        %v585 = vld [vmem:[#allocation3 + $0x88] sm:$0xff]
        %v586 = vld [vmem:[#allocation3 + $0x90] sm:$0xff]
        %v587 = vld [vmem:[#allocation3 + $0x98] sm:$0xff]
        %v588 = vld [vmem:[#allocation3 + $0xa0] sm:$0xff]
        %v589 = vld [vmem:[#allocation3 + $0xa8] sm:$0xff]
        %v590 = vld [vmem:[#allocation3 + $0xb0] sm:$0xff]
        %v591 = vld [vmem:[#allocation3 + $0xb8] sm:$0xff]
        %v592 = vld [vmem:[#allocation3 + $0xc0] sm:$0xff]
        %v593 = vld [vmem:[#allocation3 + $0xc8] sm:$0xff]
        %v594 = vld [vmem:[#allocation3 + $0xd0] sm:$0xff]
        %v595 = vld [vmem:[#allocation3 + $0xd8] sm:$0xff]
        %v596 = vld [vmem:[#allocation3 + $0xe0] sm:$0xff]
        %v597 = vld [vmem:[#allocation3 + $0xe8] sm:$0xff]
        %v598 = vld [vmem:[#allocation3 + $0xf0] sm:$0xff]
        %v599 = vld [vmem:[#allocation3 + $0xf8] sm:$0xff]
        %v600 = vld [vmem:[%s4] sm:$0x3]
        %v602 = vlaneseq
        %v603 = vshrl.u32 %v602, 7
        %v604 = vsub.s32 0, %v603
        %v605 = vrot.slane %v600, %v604
        %v606 = vlaneseq
        %v607 = vshrl.u32 %v606, 7
        %v608 = vsub.s32 1, %v607
        %v609 = vrot.slane %v600, %v608
        %v618 = vunpack.c.l.b16 %v562
        %v619 = vunpack.c.h.b16 %v562
        %v620 = vunpack.c.l.b16 %v563
        %v621 = vunpack.c.h.b16 %v563
        %v622 = vunpack.c.l.b16 %v564
        %v623 = vunpack.c.h.b16 %v564
        %v624 = vunpack.c.l.b16 %v565
        %v625 = vunpack.c.h.b16 %v565
        %v626 = vunpack.c.l.b16 %v566
        %v627 = vunpack.c.h.b16 %v566
        %v628 = vunpack.c.l.b16 %v567
        %v629 = vunpack.c.h.b16 %v567
        %v630 = vpack.c.b16 %v620, %v618
        %v631 = vpack.c.b16 %v621, %v619
        %v632 = vpack.c.b16 %v624, %v622
        %v633 = vpack.c.b16 %v625, %v623
        %v634 = vpack.c.b16 %v628, %v626
        %v635 = vpack.c.b16 %v629, %v627
        %v674 = vunpack.c.l.b16 %v568
        %v675 = vunpack.c.h.b16 %v568
        %v676 = vunpack.c.l.b16 %v569
        %v677 = vunpack.c.h.b16 %v569
        %v678 = vunpack.c.l.b16 %v570
        %v679 = vunpack.c.h.b16 %v570
        %v680 = vunpack.c.l.b16 %v571
        %v681 = vunpack.c.h.b16 %v571
        %v682 = vunpack.c.l.b16 %v572
        %v683 = vunpack.c.h.b16 %v572
        %v684 = vunpack.c.l.b16 %v573
        %v685 = vunpack.c.h.b16 %v573
        %v686 = vunpack.c.l.b16 %v574
        %v687 = vunpack.c.h.b16 %v574
        %v688 = vunpack.c.l.b16 %v575
        %v689 = vunpack.c.h.b16 %v575
        %v690 = vunpack.c.l.b16 %v576
        %v691 = vunpack.c.h.b16 %v576
        %v692 = vunpack.c.l.b16 %v577
        %v693 = vunpack.c.h.b16 %v577
        %v694 = vunpack.c.l.b16 %v578
        %v695 = vunpack.c.h.b16 %v578
        %v696 = vunpack.c.l.b16 %v579
        %v697 = vunpack.c.h.b16 %v579
        %v698 = vunpack.c.l.b16 %v580
        %v699 = vunpack.c.h.b16 %v580
        %v700 = vunpack.c.l.b16 %v581
        %v701 = vunpack.c.h.b16 %v581
        %v702 = vunpack.c.l.b16 %v582
        %v703 = vunpack.c.h.b16 %v582
        %v704 = vunpack.c.l.b16 %v583
        %v705 = vunpack.c.h.b16 %v583
        %v706 = vunpack.c.l.b16 %v584
        %v707 = vunpack.c.h.b16 %v584
        %v708 = vunpack.c.l.b16 %v585
        %v709 = vunpack.c.h.b16 %v585
        %v710 = vunpack.c.l.b16 %v586
        %v711 = vunpack.c.h.b16 %v586
        %v712 = vunpack.c.l.b16 %v587
        %v713 = vunpack.c.h.b16 %v587
        %v714 = vunpack.c.l.b16 %v588
        %v715 = vunpack.c.h.b16 %v588
        %v716 = vunpack.c.l.b16 %v589
        %v717 = vunpack.c.h.b16 %v589
        %v718 = vunpack.c.l.b16 %v590
        %v719 = vunpack.c.h.b16 %v590
        %v720 = vunpack.c.l.b16 %v591
        %v721 = vunpack.c.h.b16 %v591
        %v722 = vunpack.c.l.b16 %v592
        %v723 = vunpack.c.h.b16 %v592
        %v724 = vunpack.c.l.b16 %v593
        %v725 = vunpack.c.h.b16 %v593
        %v726 = vunpack.c.l.b16 %v594
        %v727 = vunpack.c.h.b16 %v594
        %v728 = vunpack.c.l.b16 %v595
        %v729 = vunpack.c.h.b16 %v595
        %v730 = vunpack.c.l.b16 %v596
        %v731 = vunpack.c.h.b16 %v596
        %v732 = vunpack.c.l.b16 %v597
        %v733 = vunpack.c.h.b16 %v597
        %v734 = vunpack.c.l.b16 %v598
        %v735 = vunpack.c.h.b16 %v598
        %v736 = vunpack.c.l.b16 %v599
        %v737 = vunpack.c.h.b16 %v599
        %v738 = vpack.c.b16 %v676, %v674
        %v739 = vpack.c.b16 %v677, %v675
        %v740 = vpack.c.b16 %v680, %v678
        %v741 = vpack.c.b16 %v681, %v679
        %v742 = vpack.c.b16 %v684, %v682
        %v743 = vpack.c.b16 %v685, %v683
        %v744 = vpack.c.b16 %v688, %v686
        %v745 = vpack.c.b16 %v689, %v687
        %v746 = vpack.c.b16 %v692, %v690
        %v747 = vpack.c.b16 %v693, %v691
        %v748 = vpack.c.b16 %v696, %v694
        %v749 = vpack.c.b16 %v697, %v695
        %v750 = vpack.c.b16 %v700, %v698
        %v751 = vpack.c.b16 %v701, %v699
        %v752 = vpack.c.b16 %v704, %v702
        %v753 = vpack.c.b16 %v705, %v703
        %v754 = vpack.c.b16 %v708, %v706
        %v755 = vpack.c.b16 %v709, %v707
        %v756 = vpack.c.b16 %v712, %v710
        %v757 = vpack.c.b16 %v713, %v711
        %v758 = vpack.c.b16 %v716, %v714
        %v759 = vpack.c.b16 %v717, %v715
        %v760 = vpack.c.b16 %v720, %v718
        %v761 = vpack.c.b16 %v721, %v719
        %v762 = vpack.c.b16 %v724, %v722
        %v763 = vpack.c.b16 %v725, %v723
        %v764 = vpack.c.b16 %v728, %v726
        %v765 = vpack.c.b16 %v729, %v727
        %v766 = vpack.c.b16 %v732, %v730
        %v767 = vpack.c.b16 %v733, %v731
        %v768 = vpack.c.b16 %v736, %v734
        %v769 = vpack.c.b16 %v737, %v735
        %802 = vmatprep.subr.bf16.mxu0 %v753
        %803 = vmatpush1.bf16.msra.mxu0 %v752
        %804 = vmatprep.subr.bf16.mxu0 %v751
        %805 = vmatpush1.bf16.msra.mxu0 %v750
        %806 = vmatprep.subr.bf16.mxu0 %v749
        %807 = vmatpush1.bf16.msra.mxu0 %v748
        %808 = vmatprep.subr.bf16.mxu0 %v747
        %809 = vmatpush1.bf16.msra.mxu0 %v746
        %810 = vmatprep.subr.bf16.mxu0 %v745
        %811 = vmatpush1.bf16.msra.mxu0 %v744
        %812 = vmatprep.subr.bf16.mxu0 %v743
        %813 = vmatpush1.bf16.msra.mxu0 %v742
        %814 = vmatprep.subr.bf16.mxu0 %v741
        %815 = vmatpush1.bf16.msra.mxu0 %v740
        %816 = vmatprep.subr.bf16.mxu0 %v739
        %817 = vmatpush1.bf16.msra.mxu0 %v738
        %818 = vmatprep.subr.bf16.mxu0 %v769
        %819 = vmatpush2.bf16.msra.mxu0 %v768
        %820 = vmatprep.subr.bf16.mxu0 %v767
        %821 = vmatpush2.bf16.msra.mxu0 %v766
        %822 = vmatprep.subr.bf16.mxu0 %v765
        %823 = vmatpush2.bf16.msra.mxu0 %v764
        %824 = vmatprep.subr.bf16.mxu0 %v763
        %825 = vmatpush2.bf16.msra.mxu0 %v762
        %826 = vmatprep.subr.bf16.mxu0 %v761
        %827 = vmatpush2.bf16.msra.mxu0 %v760
        %828 = vmatprep.subr.bf16.mxu0 %v759
        %829 = vmatpush2.bf16.msra.mxu0 %v758
        %830 = vmatprep.subr.bf16.mxu0 %v757
        %831 = vmatpush2.bf16.msra.mxu0 %v756
        %832 = vmatprep.subr.bf16.mxu0 %v755
        %833 = vmatpush2.bf16.msra.mxu0 %v754
        %834 = vmatprep.mubr.bf16.mxu0 %v631
        %835 = vmatmul.mubr.bf16.gmra.mxu0 %v630
        %v836 = vpop.f32.mrf.mxu0
        %v837 = vadd.f32 %v605, %v836
        %v838 = vpop.f32.mrf.mxu0
        %v839 = vadd.f32 %v609, %v838
        %v840 = vpop.f32.mrf.mxu0
        %v841 = vadd.f32 %v605, %v840
        %v842 = vpop.f32.mrf.mxu0
        %v843 = vadd.f32 %v609, %v842
        %844 = vmatprep.mubr.bf16.mxu0 %v633
        %845 = vmatmul.mubr.bf16.gmra.mxu0 %v632
        %v846 = vpop.f32.mrf.mxu0
        %v847 = vadd.f32 %v605, %v846
        %v848 = vpop.f32.mrf.mxu0
        %v849 = vadd.f32 %v609, %v848
        %v850 = vpop.f32.mrf.mxu0
        %v851 = vadd.f32 %v605, %v850
        %v852 = vpop.f32.mrf.mxu0
        %v853 = vadd.f32 %v609, %v852
        %854 = vmatprep.mubr.bf16.mxu0 %v635
        %855 = vmatmul.mubr.bf16.gmra.mxu0 %v634
        %v856 = vpop.f32.mrf.mxu0
        %v857 = vadd.f32 %v605, %v856
        %v858 = vpop.f32.mrf.mxu0
        %v859 = vadd.f32 %v609, %v858
        %v860 = vpop.f32.mrf.mxu0
        %v861 = vadd.f32 %v605, %v860
        %v862 = vpop.f32.mrf.mxu0
        %v863 = vadd.f32 %v609, %v862
        %864 = vdwg.mxu0
        %v865 = vmax.f32 %v837, 0.0
        %v866 = vmax.f32 %v839, 0.0
        %v867 = vmax.f32 %v841, 0.0
        %v868 = vmax.f32 %v843, 0.0
        %v869 = vmax.f32 %v847, 0.0
        %v870 = vmax.f32 %v849, 0.0
        %v871 = vmax.f32 %v851, 0.0
        %v872 = vmax.f32 %v853, 0.0
        %v873 = vmax.f32 %v857, 0.0
        %v874 = vmax.f32 %v859, 0.0
        %v875 = vmax.f32 %v861, 0.0
        %v876 = vmax.f32 %v863, 0.0
        %v877 = vpack.c.bf16 %v867, %v865
        %v878 = vpack.c.bf16 %v868, %v866
        %v879 = vpack.c.bf16 %v871, %v869
        %v880 = vpack.c.bf16 %v872, %v870
        %v881 = vpack.c.bf16 %v875, %v873
        %v882 = vpack.c.bf16 %v876, %v874
        %v889 = vunpack.c.l.b16 %v877
        %v890 = vunpack.c.l.b16 %v878
        %v891 = vunpack.c.h.b16 %v877
        %v892 = vunpack.c.h.b16 %v878
        %v893 = vunpack.c.l.b16 %v879
        %v894 = vunpack.c.l.b16 %v880
        %v895 = vunpack.c.h.b16 %v879
        %v896 = vunpack.c.h.b16 %v880
        %v897 = vunpack.c.l.b16 %v881
        %v898 = vunpack.c.l.b16 %v882
        %v899 = vunpack.c.h.b16 %v881
        %v900 = vunpack.c.h.b16 %v882
        %v901 = vpack.c.b16 %v890, %v889
        %v902 = vpack.c.b16 %v892, %v891
        %v903 = vpack.c.b16 %v894, %v893
        %v904 = vpack.c.b16 %v896, %v895
        %v905 = vpack.c.b16 %v898, %v897
        %v906 = vpack.c.b16 %v900, %v899
        %913 = vst [vmem:[#allocation2] sm:$0xff] %v901
        %914 = vst [vmem:[#allocation2 + $0x8] sm:$0xff] %v902
        %915 = vst [vmem:[#allocation2 + $0x10] sm:$0xff] %v903
        %916 = vst [vmem:[#allocation2 + $0x18] sm:$0xff] %v904
        %917 = vst [vmem:[#allocation2 + $0x20] sm:$0xff] %v905
        %918 = vst [vmem:[#allocation2 + $0x28] sm:$0xff] %v906
        %v919 = vld [vmem:[#allocation2] sm:$0xff]
        %v920 = vld [vmem:[#allocation2 + $0x8] sm:$0xff]
        %v921 = vld [vmem:[#allocation2 + $0x10] sm:$0xff]
        %v922 = vld [vmem:[#allocation2 + $0x18] sm:$0xff]
        %v923 = vld [vmem:[#allocation2 + $0x20] sm:$0xff]
        %v924 = vld [vmem:[#allocation2 + $0x28] sm:$0xff]
        %v925 = vld [vmem:[#allocation5] sm:$0xf]
        %v926 = vld [vmem:[#allocation5 + $0x4] sm:$0xf]
        %v927 = vld [vmem:[#allocation5 + $0x8] sm:$0xf]
        %v928 = vld [vmem:[#allocation5 + $0xc] sm:$0xf]
        %v929 = vld [vmem:[#allocation5 + $0x10] sm:$0xf]
        %v930 = vld [vmem:[#allocation5 + $0x14] sm:$0xf]
        %v931 = vld [vmem:[#allocation5 + $0x18] sm:$0xf]
        %v932 = vld [vmem:[#allocation5 + $0x1c] sm:$0xf]
        %v933 = vld [vmem:[#allocation5 + $0x20] sm:$0xf]
        %v934 = vld [vmem:[#allocation5 + $0x24] sm:$0xf]
        %v935 = vld [vmem:[#allocation5 + $0x28] sm:$0xf]
        %v936 = vld [vmem:[#allocation5 + $0x2c] sm:$0xf]
        %v937 = vld [vmem:[#allocation5 + $0x30] sm:$0xf]
        %v938 = vld [vmem:[#allocation5 + $0x34] sm:$0xf]
        %v939 = vld [vmem:[#allocation5 + $0x38] sm:$0xf]
        %v940 = vld [vmem:[#allocation5 + $0x3c] sm:$0xf]
        %v941 = vld [vmem:[#allocation5 + $0x40] sm:$0xf]
        %v942 = vld [vmem:[#allocation5 + $0x44] sm:$0xf]
        %v943 = vld [vmem:[#allocation5 + $0x48] sm:$0xf]
        %v944 = vld [vmem:[#allocation5 + $0x4c] sm:$0xf]
        %v945 = vld [vmem:[#allocation5 + $0x50] sm:$0xf]
        %v946 = vld [vmem:[#allocation5 + $0x54] sm:$0xf]
        %v947 = vld [vmem:[#allocation5 + $0x58] sm:$0xf]
        %v948 = vld [vmem:[#allocation5 + $0x5c] sm:$0xf]
        %v949 = vld [vmem:[#allocation5 + $0x60] sm:$0xf]
        %v950 = vld [vmem:[#allocation5 + $0x64] sm:$0xf]
        %v951 = vld [vmem:[#allocation5 + $0x68] sm:$0xf]
        %v952 = vld [vmem:[#allocation5 + $0x6c] sm:$0xf]
        %v953 = vld [vmem:[#allocation5 + $0x70] sm:$0xf]
        %v954 = vld [vmem:[#allocation5 + $0x74] sm:$0xf]
        %v955 = vld [vmem:[#allocation5 + $0x78] sm:$0xf]
        %v956 = vld [vmem:[#allocation5 + $0x7c] sm:$0xf]
        %v957 = vld [vmem:[%s6] sm:$0x1]
        %v959 = vlaneseq
        %v960 = vshrl.u32 %v959, 7
        %v961 = vsub.s32 0, %v960
        %v962 = vrot.slane %v957, %v961
        %v970 = vunpack.c.l.b16 %v919
        %v971 = vunpack.c.h.b16 %v919
        %v972 = vunpack.c.l.b16 %v920
        %v973 = vunpack.c.h.b16 %v920
        %v974 = vunpack.c.l.b16 %v921
        %v975 = vunpack.c.h.b16 %v921
        %v976 = vunpack.c.l.b16 %v922
        %v977 = vunpack.c.h.b16 %v922
        %v978 = vunpack.c.l.b16 %v923
        %v979 = vunpack.c.h.b16 %v923
        %v980 = vunpack.c.l.b16 %v924
        %v981 = vunpack.c.h.b16 %v924
        %v982 = vpack.c.b16 %v972, %v970
        %v983 = vpack.c.b16 %v973, %v971
        %v984 = vpack.c.b16 %v976, %v974
        %v985 = vpack.c.b16 %v977, %v975
        %v986 = vpack.c.b16 %v980, %v978
        %v987 = vpack.c.b16 %v981, %v979
        %v1026 = vunpack.c.l.b16 %v925
        %v1027 = vunpack.c.l.b16 %v926
        %v1028 = vunpack.c.l.b16 %v927
        %v1029 = vunpack.c.l.b16 %v928
        %v1030 = vunpack.c.l.b16 %v929
        %v1031 = vunpack.c.l.b16 %v930
        %v1032 = vunpack.c.l.b16 %v931
        %v1033 = vunpack.c.l.b16 %v932
        %v1034 = vunpack.c.l.b16 %v933
        %v1035 = vunpack.c.l.b16 %v934
        %v1036 = vunpack.c.l.b16 %v935
        %v1037 = vunpack.c.l.b16 %v936
        %v1038 = vunpack.c.l.b16 %v937
        %v1039 = vunpack.c.l.b16 %v938
        %v1040 = vunpack.c.l.b16 %v939
        %v1041 = vunpack.c.l.b16 %v940
        %v1042 = vunpack.c.l.b16 %v941
        %v1043 = vunpack.c.l.b16 %v942
        %v1044 = vunpack.c.l.b16 %v943
        %v1045 = vunpack.c.l.b16 %v944
        %v1046 = vunpack.c.l.b16 %v945
        %v1047 = vunpack.c.l.b16 %v946
        %v1048 = vunpack.c.l.b16 %v947
        %v1049 = vunpack.c.l.b16 %v948
        %v1050 = vunpack.c.l.b16 %v949
        %v1051 = vunpack.c.l.b16 %v950
        %v1052 = vunpack.c.l.b16 %v951
        %v1053 = vunpack.c.l.b16 %v952
        %v1054 = vunpack.c.l.b16 %v953
        %v1055 = vunpack.c.l.b16 %v954
        %v1056 = vunpack.c.l.b16 %v955
        %v1057 = vunpack.c.l.b16 %v956
        %v1058 = vpack.c.b16 %v1027, %v1026
        %v1059 = vpack.c.b16 %v1029, %v1028
        %v1060 = vpack.c.b16 %v1031, %v1030
        %v1061 = vpack.c.b16 %v1033, %v1032
        %v1062 = vpack.c.b16 %v1035, %v1034
        %v1063 = vpack.c.b16 %v1037, %v1036
        %v1064 = vpack.c.b16 %v1039, %v1038
        %v1065 = vpack.c.b16 %v1041, %v1040
        %v1066 = vpack.c.b16 %v1043, %v1042
        %v1067 = vpack.c.b16 %v1045, %v1044
        %v1068 = vpack.c.b16 %v1047, %v1046
        %v1069 = vpack.c.b16 %v1049, %v1048
        %v1070 = vpack.c.b16 %v1051, %v1050
        %v1071 = vpack.c.b16 %v1053, %v1052
        %v1072 = vpack.c.b16 %v1055, %v1054
        %v1073 = vpack.c.b16 %v1057, %v1056
        %1090 = vmatprep.subr.bf16.mxu0 0
        %1091 = vmatpush1.bf16.msra.mxu0 %v1065
        %1092 = vmatprep.subr.bf16.mxu0 0
        %1093 = vmatpush1.bf16.msra.mxu0 %v1064
        %1094 = vmatprep.subr.bf16.mxu0 0
        %1095 = vmatpush1.bf16.msra.mxu0 %v1063
        %1096 = vmatprep.subr.bf16.mxu0 0
        %1097 = vmatpush1.bf16.msra.mxu0 %v1062
        %1098 = vmatprep.subr.bf16.mxu0 0
        %1099 = vmatpush1.bf16.msra.mxu0 %v1061
        %1100 = vmatprep.subr.bf16.mxu0 0
        %1101 = vmatpush1.bf16.msra.mxu0 %v1060
        %1102 = vmatprep.subr.bf16.mxu0 0
        %1103 = vmatpush1.bf16.msra.mxu0 %v1059
        %1104 = vmatprep.subr.bf16.mxu0 0
        %1105 = vmatpush1.bf16.msra.mxu0 %v1058
        %1106 = vmatprep.subr.bf16.mxu0 0
        %1107 = vmatpush2.bf16.msra.mxu0 %v1073
        %1108 = vmatprep.subr.bf16.mxu0 0
        %1109 = vmatpush2.bf16.msra.mxu0 %v1072
        %1110 = vmatprep.subr.bf16.mxu0 0
        %1111 = vmatpush2.bf16.msra.mxu0 %v1071
        %1112 = vmatprep.subr.bf16.mxu0 0
        %1113 = vmatpush2.bf16.msra.mxu0 %v1070
        %1114 = vmatprep.subr.bf16.mxu0 0
        %1115 = vmatpush2.bf16.msra.mxu0 %v1069
        %1116 = vmatprep.subr.bf16.mxu0 0
        %1117 = vmatpush2.bf16.msra.mxu0 %v1068
        %1118 = vmatprep.subr.bf16.mxu0 0
        %1119 = vmatpush2.bf16.msra.mxu0 %v1067
        %1120 = vmatprep.subr.bf16.mxu0 0
        %1121 = vmatpush2.bf16.msra.mxu0 %v1066
        %1122 = vmatprep.mubr.bf16.mxu0 %v983
        %1123 = vmatmul.mubr.bf16.gmra.mxu0 %v982
        %v1124 = vpop.f32.mrf.mxu0
        %v1125 = vadd.f32 %v962, %v1124
        %v1126 = vpop.f32.mrf.mxu0
        %v1127 = vpop.f32.mrf.mxu0
        %v1128 = vadd.f32 %v962, %v1127
        %v1129 = vpop.f32.mrf.mxu0
        %1130 = vmatprep.mubr.bf16.mxu0 %v985
        %1131 = vmatmul.mubr.bf16.gmra.mxu0 %v984
        %v1132 = vpop.f32.mrf.mxu0
        %v1133 = vadd.f32 %v962, %v1132
        %v1134 = vpop.f32.mrf.mxu0
        %v1135 = vpop.f32.mrf.mxu0
        %v1136 = vadd.f32 %v962, %v1135
        %v1137 = vpop.f32.mrf.mxu0
        %1138 = vmatprep.mubr.bf16.mxu0 %v987
        %1139 = vmatmul.mubr.bf16.gmra.mxu0 %v986
        %v1140 = vpop.f32.mrf.mxu0
        %v1141 = vadd.f32 %v962, %v1140
        %v1142 = vpop.f32.mrf.mxu0
        %v1143 = vpop.f32.mrf.mxu0
        %v1144 = vadd.f32 %v962, %v1143
        %v1145 = vpop.f32.mrf.mxu0
        %1146 = vdwg.mxu0
        %1147 = vst [vmem:[%s310] sm:$0xff] %v1125
        %1148 = vst [vmem:[%s310 + $0x8] sm:$0xff] %v1128
        %1149 = vst [vmem:[%s310 + $0x10] sm:$0xff] %v1133
        %1150 = vst [vmem:[%s310 + $0x18] sm:$0xff] %v1136
        %1151 = vst [vmem:[%s310 + $0x20] sm:$0xff] %v1141
        %1152 = vst [vmem:[%s310 + $0x28] sm:$0xff] %v1144
        %s1153 = smul.u32 6, %s20
        %p1154 = scmp.lt.s32.totalorder %s1153, 11
        %s1155 = scalar_select %p1154, %s1153, 11
        %s1156 = smul.addr %s1155, 8
        %s1157 = scalar_lea.vmem %s7, %s1156
        // Predicated region
        $region57: #{_mlp_forward_impl.1} parent=47 // pred_check
          %p1158 = pneg %p190
        $region58: #{_mlp_forward_impl.1} parent=47 // pred_check_branch
          %1160 = sbr.rel (%p1158) target = $region60
        $region59: #{_mlp_forward_impl.1} parent=47 // pred_region
          %s1161 = smul.u32 6, %s20
        $region60: #{_mlp_forward_impl.1} parent=47 // pred_fallthru
          _
      $region48: #{_mlp_forward_impl.1} parent=5 // pred_fallthru
        _
      %p1162 = scmp.le.s32.totalorder 2, %s15
      // Predicated region
      $region61: #{_mlp_forward_impl.1} parent=5 // pred_check
        %p1163 = pneg %p1162
      $region62: #{_mlp_forward_impl.1} parent=5 // pred_check_branch
        %1165 = sbr.rel (%p1163) target = $region64
      $region63: #{_mlp_forward_impl.1} parent=5 // pred_region
        %s1166 = ssub.s32 %s15, 2
        // Predicated region
        $region65: #{_mlp_forward_impl.1} parent=63 // pred_check
          %p1167 = pneg %p196
        $region66: #{_mlp_forward_impl.1} parent=63 // pred_check_branch
          %1169 = sbr.rel (%p1167) target = $region68
        $region67: #{_mlp_forward_impl.1} parent=63 // pred_region
          %s1170 = smul.u32 6, %s21
          %p1171 = scmp.lt.s32.totalorder %s1170, 11
          %s1172 = scalar_select %p1171, %s1170, 11
          %s1173 = smul.addr %s1172, 8
          %s1174 = scalar_lea.vmem %s7, %s1173
        $region68: #{_mlp_forward_impl.1} parent=63 // pred_fallthru
          _
      $region64: #{_mlp_forward_impl.1} parent=5 // pred_fallthru
        _
    $region6: #{_mlp_forward_impl.1} parent=1 // loop_footer
      %s19 = sadd.s32 1, %s15
    $region7: #{_mlp_forward_impl.1} parent=1 // loop_footer_branch
      %14 = sbr.rel target = $region3
    $region8: #{_mlp_forward_impl.1} parent=1 // loop_exit
      _
    %1175 = vsyncpa [#allocation4], 1
    %s1176 = scalar_lea.sflag [#allocation4], 1
    %1177 = vsyncpa %s1176, 1
    %1178 = vsyncpa [#allocation6], 1

</llo_original>
